<compile_context>
chip_gen: v5e
topology: v5e:2x2
jax: 0.10.0
libtpu: 0.0.40
codegen_flags: <defaults>
</compile_context>

<pallas_src>
import jax
import jax.numpy as jnp
from jax.experimental import pallas as pl
from jax.experimental.pallas import tpu as pltpu


_LANE = 128
_TARGET_BLOCK_BYTES = 4 * 1024 * 1024   # ~4 MiB/block -> 4 double-buffered bufs ~16 MiB
_MIN_SPLIT_BYTES = 2 * 1024 * 1024      # only force multi-step grids above this
_VMEM_LIMIT_BYTES = 32 * 1024 * 1024    # scoped-VMEM budget, safe on v5e/v6e/v7x
_SMALL_FALLBACK_BYTES = 16 * 1024       # below this, let XLA fuse the scale for free


def _num_tensorcores():
    """Best-effort TensorCore count (v7x has 2/chip); defaults to 1 (v5e/v6e)."""
    try:
        info = pltpu.get_tpu_info()
    except Exception:
        return 1
    for name in ("num_cores", "core_count", "num_tensorcores",
                 "tensorcore_count", "cores_per_chip", "num_tensor_cores"):
        val = getattr(info, name, None)
        if isinstance(val, int) and not isinstance(val, bool) and 0 < val <= 8:
            return val
    return 1


_NUM_TC = _num_tensorcores()


def _scale_kernel(scale_ref, g_ref, o_ref):
    # scale (= -coeff) lives in SMEM (scalar prefetch) so a single compiled
    # kernel serves every coeff value.  Multiply in f32, cast once on the way
    # out (avoids double-rounding / truncating coeff for low-precision dtypes).
    o_ref[...] = (g_ref[...].astype(jnp.float32) * scale_ref[0]).astype(o_ref.dtype)


def _sublane_multiple(dtype):
    return {4: 8, 2: 16, 1: 32}.get(jnp.dtype(dtype).itemsize, 8)


def _round_up(x, m):
    return -(-x // m) * m


def _choose_lead_tile(nlead, slab_bytes, sub):
    """Rows-per-block along the tiled leading axis (multiple of `sub`, or full)."""
    tr = max(sub, (_TARGET_BLOCK_BYTES // max(slab_bytes, 1)) // sub * sub)
    tr = min(tr, nlead)
    total = nlead * slab_bytes
    if _NUM_TC > 1 and total >= _MIN_SPLIT_BYTES and nlead >= _NUM_TC * sub:
        # Multi-TC chip (v7x): make the step count a multiple of the TC count
        # with (nearly) equal-sized blocks so neither core idles on small grids.
        nsteps = pl.cdiv(nlead, tr)
        if nsteps % _NUM_TC != 0:
            nsteps = _round_up(nsteps, _NUM_TC)
            tr = min(nlead, max(sub, _round_up(pl.cdiv(nlead, nsteps), sub)))
    return tr


def _pallas_scale_nd(g_nd, scale_arr, tile_lead):
    """g_nd * scale via Pallas; blocks tile the leading axis, trailing dims full."""
    lead = g_nd.shape[0]
    trailing = g_nd.shape[1:]
    block = (tile_lead,) + trailing
    zeros = (0,) * len(trailing)

    def idx_map(i, scale_smem):
        del scale_smem
        return (i,) + zeros

    return pl.pallas_call(
        _scale_kernel,
        out_shape=jax.ShapeDtypeStruct(g_nd.shape, g_nd.dtype),
        grid_spec=pltpu.PrefetchScalarGridSpec(
            num_scalar_prefetch=1,
            grid=(pl.cdiv(lead, tile_lead),),   # ragged tail handled by edge masking
            in_specs=[pl.BlockSpec(block, idx_map)],
            out_specs=pl.BlockSpec(block, idx_map),
        ),
        compiler_params=pltpu.CompilerParams(
            dimension_semantics=("parallel",),
            vmem_limit_bytes=_VMEM_LIMIT_BYTES,
        ),
        # Alias the cotangent buffer (same shape/dtype; wrapper reshapes are
        # layout-preserving) -> no second full-size HBM allocation when donated.
        input_output_aliases={1: 0},
    )(scale_arr, g_nd)


def _reverse_scale(g, scale):
    """Elementwise g * scale (scale: traced () f32, = -coeff), for the GRL backward."""
    dtype = g.dtype
    itemsize = jnp.dtype(dtype).itemsize
    nbytes = g.size * itemsize

    def xla_fallback():
        # Tiny / awkward shapes: a plain multiply that XLA fuses upstream is
        # cheaper than a pallas_call launch and needs no pad+slice HBM copies.
        return (g.astype(jnp.float32) * scale).astype(dtype)

    if (g.size == 0 or g.ndim == 0
            or not jnp.issubdtype(dtype, jnp.floating)
            or nbytes < _SMALL_FALLBACK_BYTES):
        return xla_fallback()

    sub = _sublane_multiple(dtype)
    scale_arr = jnp.reshape(scale, (1,)).astype(jnp.float32)
    last = g.shape[-1]

    if last % _LANE == 0:
        # Lane-dense fast path: collapse leading dims only (layout-preserving).
        rows = g.size // last
        row_bytes = last * itemsize
        if row_bytes * sub * 4 > _VMEM_LIMIT_BYTES:
            return xla_fallback()   # pathological last dim; rare for gradients
        g2d = g.reshape(rows, last)
        tr = _choose_lead_tile(rows, row_bytes, sub)
        out = _pallas_scale_nd(g2d, scale_arr, tr)
        return out.reshape(g.shape)

    if g.ndim >= 2:
        # Layout-preserving 3-D path: block spans the FULL last two dims (legal
        # even when not (8,128)-divisible); grid over collapsed leading dims.
        # Avoids the ravel->(rows,128) relayout and any pad/slice copies.
        h, w = g.shape[-2], g.shape[-1]
        lead = g.size // (h * w)
        slab_bytes = _round_up(h, sub) * _round_up(w, _LANE) * itemsize
        if slab_bytes * 4 > _VMEM_LIMIT_BYTES:
            return xla_fallback()   # huge unaligned trailing dims; rare
        g3d = g.reshape((lead, h, w))
        tr = _choose_lead_tile(lead, slab_bytes, 1)
        out = _pallas_scale_nd(g3d, scale_arr, tr)
        return out.reshape(g.shape)

    # 1-D and not 128-divisible: no layout-safe tiling without a pad copy.
    return xla_fallback()


@jax.custom_vjp
def _grl(x, coeff):
    # Forward: identity (x * 1.0).  True no-op: no kernel, no HBM round trip.
    del coeff
    return x


def _grl_fwd(x, coeff):
    return x, coeff


def _grl_bwd(coeff, g):
    # Gradient reversal: dL/dx = -coeff * g (Pallas kernel); coeff gets no grad.
    return _reverse_scale(g, -coeff), jnp.zeros_like(coeff)


_grl.defvjp(_grl_fwd, _grl_bwd)


def gradient_reverse_layer(x, coeff=1.0):
    """GradientReverseLayer: y = x in forward; dL/dx = -coeff * dL/dy in backward.

    `coeff` is threaded through as a traced () f32 array (read from SMEM inside
    the kernel), so per-step GRL schedules cause no recompiles of the kernel or
    the surrounding jit.
    """
    return _grl(x, jnp.asarray(coeff, dtype=jnp.float32))


if __name__ == "__main__":
    key = jax.random.PRNGKey(0)
    k1, k2, k3, k4 = jax.random.split(key, 4)

    # --- Lane-dense feature tensor (batch=2, seq=16, hidden=512): 2-D Pallas path.
    x = jax.random.normal(k1, (2, 16, 512), dtype=jnp.float32)

    # Forward: exact identity (no kernel launch).
    y = jax.block_until_ready(gradient_reverse_layer(x, 1.0))
    assert y.shape == x.shape and y.dtype == x.dtype
    assert bool(jnp.all(y == x))

    # Backward: -coeff * g via the Pallas kernel (through jax.grad).
    coeff = 0.5
    g = jax.block_until_ready(
        jax.grad(lambda a: jnp.sum(gradient_reverse_layer(a, coeff)))(x))
    assert bool(jnp.allclose(g, -coeff * jnp.ones_like(x)))

    # Different (traced) coeff reuses the same compiled kernel.
    g2 = jax.block_until_ready(
        jax.grad(lambda a: jnp.sum(gradient_reverse_layer(a, 2.0) * a))(x))
    assert bool(jnp.allclose(g2, -x, atol=1e-6))

    # --- Conv-style NCHW cotangent (last dim 16, not 128-divisible): 3-D Pallas
    # path with a block spanning the full last two dims (no relayout / padding).
    xc = jax.random.normal(k2, (4, 8, 16, 16), dtype=jnp.float32)
    gc = jax.block_until_ready(
        jax.grad(lambda a: jnp.sum(gradient_reverse_layer(a, 1.5)))(xc))
    assert bool(jnp.allclose(gc, -1.5 * jnp.ones_like(xc)))

    # --- bf16 cotangent: f32 multiply inside the kernel, single cast on output.
    xb = jax.random.normal(k3, (2, 16, 512), dtype=jnp.bfloat16)
    gb = jax.block_until_ready(
        jax.grad(
            lambda a: jnp.sum(gradient_reverse_layer(a, 0.25).astype(jnp.float32))
        )(xb))
    assert gb.dtype == jnp.bfloat16
    assert bool(jnp.allclose(gb.astype(jnp.float32),
                             -0.25 * jnp.ones(xb.shape, jnp.float32)))

    # --- Tiny / awkward shapes take the fused XLA path (no kernel launch).
    xt = jax.random.normal(k4, (2, 4, 16, 16), dtype=jnp.float32)
    gt = jax.block_until_ready(
        jax.grad(lambda a: jnp.sum(gradient_reverse_layer(a, 2.0)))(xt))
    assert bool(jnp.allclose(gt, -2.0 * jnp.ones_like(xt)))

    zo = jax.random.normal(key, (3, 5, 7), dtype=jnp.float32)
    go = jax.block_until_ready(
        jax.grad(lambda a: jnp.sum(gradient_reverse_layer(a, 1.5)))(zo))
    assert bool(jnp.allclose(go, -1.5 * jnp.ones_like(zo)))

    print("KERNEL_OK")
</pallas_src>

<mosaic_0001>
module attributes {stable_mosaic.version = 11 : i64} {
  func.func @_scale_kernel(%arg0: i32, %arg1: memref<1xf32, #tpu.memory_space<smem>>, %arg2: memref<32x512xf32, #tpu.memory_space<vmem>>, %arg3: memref<32x512xf32, #tpu.memory_space<vmem>>) attributes {dimension_semantics = [#tpu.dimension_semantics<parallel>], iteration_bounds = array<i64: 1>, scalar_prefetch = 1 : i64, scratch_operands = 0 : i64, tpu.core_type = #tpu.core_type<tc>, window_params = [{transform_indices = @transform_0, window_bounds = array<i64: 32, 512>}, {transform_indices = @transform_1, window_bounds = array<i64: 32, 512>}]} {
    %c0 = arith.constant 0 : index
    %c0_0 = arith.constant 0 : index
    %0 = vector.load %arg2[%c0, %c0_0] : memref<32x512xf32, #tpu.memory_space<vmem>>, vector<32x512xf32>
    %c0_1 = arith.constant 0 : index
    %1 = memref.load %arg1[%c0_1] : memref<1xf32, #tpu.memory_space<smem>>
    %2 = vector.broadcast %1 : f32 to vector<32x512xf32>
    %3 = arith.mulf %0, %2 : vector<32x512xf32>
    %c0_2 = arith.constant 0 : index
    %c0_3 = arith.constant 0 : index
    %4 = vector.load %arg3[%c0_2, %c0_3] : memref<32x512xf32, #tpu.memory_space<vmem>>, vector<32x512xf32>
    tpu.vector_store %arg3[%c0_2, %c0_3], %3 {strides = array<i32>} : memref<32x512xf32, #tpu.memory_space<vmem>>, vector<32x512xf32>,
    return
  }
  func.func @transform_0(%arg0: i32, %arg1: memref<1xf32, #tpu.memory_space<smem>>) -> (i32, i32) {
    %c0_i32 = arith.constant 0 : i32
    %c0_i32_0 = arith.constant 0 : i32
    return %arg0, %c0_i32 : i32, i32
  }
  func.func @transform_1(%arg0: i32, %arg1: memref<1xf32, #tpu.memory_space<smem>>) -> (i32, i32) {
    %c0_i32 = arith.constant 0 : i32
    %c0_i32_0 = arith.constant 0 : i32
    return %arg0, %c0_i32 : i32, i32
  }
}

</mosaic_0001>

<llo_original>
// kernel: tpu_custom_call.1
$region0: #{tpu_custom_call.1}
  #allocation0 [shape = 'u32[]', space=smem, size = 0x4, offset = 0x4, fixed_abs, tag = 'smem constant byte address 0x4 - core index']
  #allocation1 [shape = 'u32[72,128]{1,0:T(1,128)}', space=vmem, size = 0x9000, scoped, tag = 'internal scratch']
  #allocation2 [shape = 's32[1]{0}', space=sflag, size = 0x4, scoped, tag = 'scoped memory for tpu_custom_call.1']
  #allocation3 [shape = 'f32[1]{0:T(128)S(6)}', space=smem, size = 0x200, scoped, tag = 'prefetched SMEM operand 0']
  %s0 = inlined_call_operand.<no memory space> [shape: f32[1], index: 0, kind: input, shape index: {}]
  %s1 = inlined_call_operand.hbm [shape: f32[32,512], index: 1, kind: input, shape index: {}, may-alias: {1,2}]
  %s2 = inlined_call_operand.hbm [shape: f32[32,512], index: 2, kind: output, shape index: {}, may-alias: {1,2}]
  %s3 = sld [smem:[#allocation0]]
  $region18: #{tpu_custom_call.1} parent=0
    _
  %s5 = ssub.s32 1, %s3
  %s6 = scalar_select 0, %s5, %s3
  %7 = sst [smem:[#allocation3]] %s0
  $region1: #{tpu_custom_call.1} parent=0
    #allocation4 [shape = 'u8[65536]{0}', space=vmem, size = 0x10000, scoped, tag = 'input window, operand 1, single buffered']
    #allocation5 [shape = 's32[1]{0}', space=sflag, size = 0x4, scoped, tag = 'scoped memory for tpu_custom_call.1']
    #allocation6 [shape = 's32[1]{0}', space=sflag, size = 0x4, scoped, tag = 'scoped memory for tpu_custom_call.1']
    #allocation7 [shape = 'u8[65536]{0}', space=vmem, size = 0x10000, scoped, tag = 'output window, operand 0, single buffered']
    %8 = vsyncpa [#allocation5], 0
    %9 = vsyncpa [#allocation6], 0
    // Predicated region
    $region2: #{tpu_custom_call.1} parent=1 // pred_check
      _
    $region3: #{tpu_custom_call.1} parent=1 // pred_check_branch
      %11 = sbr.rel (0) target = $region5
    $region4: #{tpu_custom_call.1} parent=1 // pred_region
      %13 = vsyncadd [#allocation5], 0
      %s14 = sshll.u32 %s1, 4
      %s15 = int_to_ptr.hbm [resolvable:$true] %s14
      %s16 = sshll.u32 [#allocation4], 4
      %s17 = int_to_ptr.vmem [resolvable:$true] %s16
      %22 = dma.hbm_to_vmem [thread:$0]  %s15, 2048, %s17, [#allocation5], 512, 512, 32
    $region5: #{tpu_custom_call.1} parent=1 // pred_fallthru
      _
    // Predicated region
    $region6: #{tpu_custom_call.1} parent=1 // pred_check
      _
    $region7: #{tpu_custom_call.1} parent=1 // pred_check_branch
      %24 = sbr.rel (0) target = $region9
    $region8: #{tpu_custom_call.1} parent=1 // pred_region
      %26 = dma.done [#allocation5], 2048
    $region9: #{tpu_custom_call.1} parent=1 // pred_fallthru
      _
    %v27 = vld [vmem:[#allocation4] sm:$0xff]
    %v28 = vld [vmem:[#allocation4 + $0x8] sm:$0xff]
    %v29 = vld [vmem:[#allocation4 + $0x10] sm:$0xff]
    %v30 = vld [vmem:[#allocation4 + $0x18] sm:$0xff]
    %v31 = vld [vmem:[#allocation4 + $0x20] sm:$0xff]
    %v32 = vld [vmem:[#allocation4 + $0x28] sm:$0xff]
    %v33 = vld [vmem:[#allocation4 + $0x30] sm:$0xff]
    %v34 = vld [vmem:[#allocation4 + $0x38] sm:$0xff]
    %v35 = vld [vmem:[#allocation4 + $0x40] sm:$0xff]
    %v36 = vld [vmem:[#allocation4 + $0x48] sm:$0xff]
    %v37 = vld [vmem:[#allocation4 + $0x50] sm:$0xff]
    %v38 = vld [vmem:[#allocation4 + $0x58] sm:$0xff]
    %v39 = vld [vmem:[#allocation4 + $0x60] sm:$0xff]
    %v40 = vld [vmem:[#allocation4 + $0x68] sm:$0xff]
    %v41 = vld [vmem:[#allocation4 + $0x70] sm:$0xff]
    %v42 = vld [vmem:[#allocation4 + $0x78] sm:$0xff]
    %s43 = sld [smem:[#allocation3]]
    %v44 = vstv %s43
    %v45 = vmul.f32 %v27, %v44
    %v46 = vmul.f32 %v28, %v44
    %v47 = vmul.f32 %v29, %v44
    %v48 = vmul.f32 %v30, %v44
    %v49 = vmul.f32 %v31, %v44
    %v50 = vmul.f32 %v32, %v44
    %v51 = vmul.f32 %v33, %v44
    %v52 = vmul.f32 %v34, %v44
    %v53 = vmul.f32 %v35, %v44
    %v54 = vmul.f32 %v36, %v44
    %v55 = vmul.f32 %v37, %v44
    %v56 = vmul.f32 %v38, %v44
    %v57 = vmul.f32 %v39, %v44
    %v58 = vmul.f32 %v40, %v44
    %v59 = vmul.f32 %v41, %v44
    %v60 = vmul.f32 %v42, %v44
    %61 = vst [vmem:[#allocation7] sm:$0xff] %v45
    %62 = vst [vmem:[#allocation7 + $0x8] sm:$0xff] %v46
    %63 = vst [vmem:[#allocation7 + $0x10] sm:$0xff] %v47
    %64 = vst [vmem:[#allocation7 + $0x18] sm:$0xff] %v48
    %65 = vst [vmem:[#allocation7 + $0x20] sm:$0xff] %v49
    %66 = vst [vmem:[#allocation7 + $0x28] sm:$0xff] %v50
    %67 = vst [vmem:[#allocation7 + $0x30] sm:$0xff] %v51
    %68 = vst [vmem:[#allocation7 + $0x38] sm:$0xff] %v52
    %69 = vst [vmem:[#allocation7 + $0x40] sm:$0xff] %v53
    %70 = vst [vmem:[#allocation7 + $0x48] sm:$0xff] %v54
    %71 = vst [vmem:[#allocation7 + $0x50] sm:$0xff] %v55
    %72 = vst [vmem:[#allocation7 + $0x58] sm:$0xff] %v56
    %73 = vst [vmem:[#allocation7 + $0x60] sm:$0xff] %v57
    %74 = vst [vmem:[#allocation7 + $0x68] sm:$0xff] %v58
    %75 = vst [vmem:[#allocation7 + $0x70] sm:$0xff] %v59
    %76 = vst [vmem:[#allocation7 + $0x78] sm:$0xff] %v60
    // Predicated region
    $region10: #{tpu_custom_call.1} parent=1 // pred_check
      _
    $region11: #{tpu_custom_call.1} parent=1 // pred_check_branch
      %78 = sbr.rel (0) target = $region13
    $region12: #{tpu_custom_call.1} parent=1 // pred_region
      %80 = vsyncadd [#allocation6], 0
      %s81 = sshll.u32 [#allocation7], 4
      %s82 = int_to_ptr.vmem [resolvable:$true] %s81
      %s83 = sshll.u32 %s2, 4
      %s84 = int_to_ptr.hbm [resolvable:$true] %s83
      %89 = dma.vmem_to_hbm [thread:$0]  %s82, 2048, %s84, [#allocation6], 512, 512, 32
    $region13: #{tpu_custom_call.1} parent=1 // pred_fallthru
      _
    // Predicated region
    $region14: #{tpu_custom_call.1} parent=1 // pred_check
      _
    $region15: #{tpu_custom_call.1} parent=1 // pred_check_branch
      %91 = sbr.rel (0) target = $region17
    $region16: #{tpu_custom_call.1} parent=1 // pred_region
      %93 = dma.done [#allocation6], 2048
    $region17: #{tpu_custom_call.1} parent=1 // pred_fallthru
      _
    %94 = vsyncpa [#allocation5], 1
    %95 = vsyncpa [#allocation6], 1

</llo_original>
